<compile_context>
chip_gen: v5e
topology: v5e:2x2
jax: 0.10.0
libtpu: 0.0.40
codegen_flags: <defaults>
</compile_context>

<pallas_src>
import functools
import numpy as np
import jax
import jax.numpy as jnp
from jax.experimental import pallas as pl
from jax.experimental.pallas import tpu as pltpu


def _vmem_budget_bytes():
    """Generation-dependent VMEM budget, with headroom for compiler scratch."""
    try:
        cap = pltpu.get_tpu_info().vmem_capacity_bytes
    except Exception:
        cap = 64 * 1024 * 1024  # conservative fallback
    return int(cap * 3 // 4)


# ------------------------------ kernels -------------------------------------

def _se_fused_kernel(x_ref, w1_ref, b1_ref, w2_ref, b2_ref, o_ref, *, inv_hw):
    """Pool + FC1 + ReLU + FC2 + sigmoid + scale; one batch element per step."""
    x = x_ref[0]                                               # (H, W, C)
    s = jnp.sum(x, axis=(0, 1), keepdims=True)                 # (1, 1, C)
    s = s.reshape(1, x.shape[-1]) * inv_hw                     # (1, C)  mean
    h = jnp.dot(s, w1_ref[...], preferred_element_type=jnp.float32) + b1_ref[...]
    h = jnp.maximum(h, 0.0)                                    # (1, Csq)
    g = jnp.dot(h, w2_ref[...], preferred_element_type=jnp.float32) + b2_ref[...]
    g = jax.nn.sigmoid(g)                                      # (1, C)
    o_ref[0] = x * g[0]                                        # broadcast over H, W


def _se_reduce_kernel(x_ref, w1_ref, b1_ref, w2_ref, b2_ref, g_ref, acc_ref,
                      *, inv_hw):
    """Row-tiled channel-sum accumulation; gate computed on the last row tile."""
    r = pl.program_id(1)

    @pl.when(r == 0)
    def _():
        acc_ref[...] = jnp.zeros_like(acc_ref)

    part = jnp.sum(x_ref[0], axis=(0, 1), keepdims=True)       # (1, 1, C)
    acc_ref[...] += part.reshape(acc_ref.shape)

    @pl.when(r == pl.num_programs(1) - 1)
    def _():
        s = acc_ref[...] * inv_hw                              # (1, C)
        h = jnp.maximum(
            jnp.dot(s, w1_ref[...], preferred_element_type=jnp.float32)
            + b1_ref[...], 0.0)
        g = jax.nn.sigmoid(
            jnp.dot(h, w2_ref[...], preferred_element_type=jnp.float32)
            + b2_ref[...])
        g_ref[...] = g.reshape(g_ref.shape)


def _se_scale_kernel(x_ref, g_ref, o_ref):
    """Apply the per-(batch, channel) gate to one row tile."""
    o_ref[...] = x_ref[...] * g_ref[0, 0]                      # gate: (C,) on lanes


# ------------------------------ wrapper -------------------------------------

def squeeze_excitation(x_nchw, params, *, force_two_pass=False, row_tile=None):
    """x_nchw: (N, C, H, W). Returns (N, C, H, W)."""
    w1, b1, w2, b2 = params["w1"], params["b1"], params["w2"], params["b2"]
    N, C, H, W = x_nchw.shape
    Csq = w1.shape[1]

    x = jnp.transpose(x_nchw, (0, 2, 3, 1)).astype(jnp.float32)    # NHWC
    b1r = b1.reshape(1, Csq).astype(jnp.float32)
    b2r = b2.reshape(1, C).astype(jnp.float32)
    inv_hw = np.float32(1.0 / (H * W))

    vmem_budget = _vmem_budget_bytes()
    img_bytes = H * W * C * 4
    weight_bytes = (C * Csq * 2 + C + Csq) * 4
    use_fused = (not force_two_pass) and (4 * img_bytes + 2 * weight_bytes
                                          <= vmem_budget)

    if use_fused:
        out = pl.pallas_call(
            functools.partial(_se_fused_kernel, inv_hw=inv_hw),
            out_shape=jax.ShapeDtypeStruct((N, H, W, C), jnp.float32),
            grid=(N,),
            in_specs=[
                pl.BlockSpec((1, H, W, C), lambda n: (n, 0, 0, 0)),
                pl.BlockSpec((C, Csq), lambda n: (0, 0)),
                pl.BlockSpec((1, Csq), lambda n: (0, 0)),
                pl.BlockSpec((Csq, C), lambda n: (0, 0)),
                pl.BlockSpec((1, C), lambda n: (0, 0)),
            ],
            out_specs=pl.BlockSpec((1, H, W, C), lambda n: (n, 0, 0, 0)),
            compiler_params=pltpu.CompilerParams(
                dimension_semantics=("parallel",),
                vmem_limit_bytes=vmem_budget),
        )(x, w1, b1r, w2, b2r)
    else:
        # ---- pick a row tile that fits the VMEM budget (in+out, double-buffered)
        if row_tile is not None and H % row_tile == 0:
            th = row_tile
        else:
            th = H
            while 4 * th * W * C * 4 + 2 * weight_bytes > vmem_budget and th % 2 == 0:
                th //= 2
        n_rt = H // th

        # ---- pass 1: per-(batch, channel) gate  (N, 1, C)
        gates = pl.pallas_call(
            functools.partial(_se_reduce_kernel, inv_hw=inv_hw),
            out_shape=jax.ShapeDtypeStruct((N, 1, C), jnp.float32),
            grid=(N, n_rt),
            in_specs=[
                pl.BlockSpec((1, th, W, C), lambda n, r: (n, r, 0, 0)),
                pl.BlockSpec((C, Csq), lambda n, r: (0, 0)),
                pl.BlockSpec((1, Csq), lambda n, r: (0, 0)),
                pl.BlockSpec((Csq, C), lambda n, r: (0, 0)),
                pl.BlockSpec((1, C), lambda n, r: (0, 0)),
            ],
            out_specs=pl.BlockSpec((1, 1, C), lambda n, r: (n, 0, 0)),
            scratch_shapes=[pltpu.VMEM((1, C), jnp.float32)],
            compiler_params=pltpu.CompilerParams(
                dimension_semantics=("parallel", "arbitrary"),
                vmem_limit_bytes=vmem_budget),
        )(x, w1, b1r, w2, b2r)

        # ---- pass 2: apply gate, row-tiled
        out = pl.pallas_call(
            _se_scale_kernel,
            out_shape=jax.ShapeDtypeStruct((N, H, W, C), jnp.float32),
            grid=(N, n_rt),
            in_specs=[
                pl.BlockSpec((1, th, W, C), lambda n, r: (n, r, 0, 0)),
                pl.BlockSpec((1, 1, C), lambda n, r: (n, 0, 0)),
            ],
            out_specs=pl.BlockSpec((1, th, W, C), lambda n, r: (n, r, 0, 0)),
            compiler_params=pltpu.CompilerParams(
                dimension_semantics=("parallel", "parallel"),
                vmem_limit_bytes=vmem_budget),
        )(x, gates)

    return jnp.transpose(out, (0, 3, 1, 2))


# ------------------------------ parameters ----------------------------------

def init_params(key, channels, squeeze_channels=None):
    """Matches nn.Conv2d(k=1, bias=True) default init (Kaiming-uniform bounds)."""
    if squeeze_channels is None:
        squeeze_channels = channels // 8
    k1, k2, k3, k4 = jax.random.split(key, 4)
    bound1 = 1.0 / np.sqrt(channels)                 # fan_in of fc1 = channels
    w1 = jax.random.uniform(k1, (channels, squeeze_channels), jnp.float32,
                            -bound1, bound1)
    b1 = jax.random.uniform(k2, (squeeze_channels,), jnp.float32, -bound1, bound1)
    bound2 = 1.0 / np.sqrt(squeeze_channels)         # fan_in of fc2 = squeeze
    w2 = jax.random.uniform(k3, (squeeze_channels, channels), jnp.float32,
                            -bound2, bound2)
    b2 = jax.random.uniform(k4, (channels,), jnp.float32, -bound2, bound2)
    return {"w1": w1, "b1": b1, "w2": w2, "b2": b2}


def _se_reference(x_nchw, params):
    """Pure-JAX reference of the PyTorch forward."""
    x = x_nchw.astype(jnp.float32)
    s = jnp.mean(x, axis=(2, 3))                                  # (N, C)
    h = jnp.maximum(s @ params["w1"] + params["b1"], 0.0)
    g = jax.nn.sigmoid(h @ params["w2"] + params["b2"])
    return x * g[:, :, None, None]


# ------------------------------ main -----------------------------------------

if __name__ == "__main__":
    key = jax.random.PRNGKey(0)
    kp, kx = jax.random.split(key)

    # Small shapes consistent with the module: channels=128 -> squeeze=16.
    N, C, H, W = 2, 128, 16, 16
    x = jax.random.normal(kx, (N, C, H, W), jnp.float32)
    params = init_params(kp, C)

    ref = _se_reference(x, params)

    # Fused single-pass path (used automatically at this size).
    out = jax.jit(squeeze_excitation)(x, params)
    jax.block_until_ready(out)
    assert out.shape == (N, C, H, W)
    assert bool(jnp.all(jnp.isfinite(out)))
    np.testing.assert_allclose(np.asarray(out), np.asarray(ref),
                               rtol=1e-4, atol=1e-4)

    # Row-tiled two-pass path (the large-image path), exercised explicitly.
    out_tiled = jax.jit(functools.partial(squeeze_excitation,
                                          force_two_pass=True, row_tile=8)
                        )(x, params)
    jax.block_until_ready(out_tiled)
    np.testing.assert_allclose(np.asarray(out_tiled), np.asarray(ref),
                               rtol=1e-4, atol=1e-4)

    print("KERNEL_OK")
</pallas_src>

<mosaic_0001>
module attributes {stable_mosaic.version = 11 : i64} {
  func.func @_se_fused_kernel(%arg0: i32, %arg1: memref<1x16x16x128xf32, #tpu.memory_space<vmem>>, %arg2: memref<128x16xf32, #tpu.memory_space<vmem>>, %arg3: memref<1x16xf32, #tpu.memory_space<vmem>>, %arg4: memref<16x128xf32, #tpu.memory_space<vmem>>, %arg5: memref<1x128xf32, #tpu.memory_space<vmem>>, %arg6: memref<1x16x16x128xf32, #tpu.memory_space<vmem>>) attributes {dimension_semantics = [#tpu.dimension_semantics<parallel>], iteration_bounds = array<i64: 2>, scalar_prefetch = 0 : i64, scratch_operands = 0 : i64, tpu.core_type = #tpu.core_type<tc>, window_params = [{transform_indices = @transform_0, window_bounds = array<i64: 1, 16, 16, 128>}, {pipeline_mode = #tpu.pipeline_mode<synchronous>, transform_indices = @transform_1, window_bounds = array<i64: 128, 16>}, {pipeline_mode = #tpu.pipeline_mode<synchronous>, transform_indices = @transform_2, window_bounds = array<i64: 1, 16>}, {pipeline_mode = #tpu.pipeline_mode<synchronous>, transform_indices = @transform_3, window_bounds = array<i64: 16, 128>}, {pipeline_mode = #tpu.pipeline_mode<synchronous>, transform_indices = @transform_4, window_bounds = array<i64: 1, 128>}, {transform_indices = @transform_5, window_bounds = array<i64: 1, 16, 16, 128>}]} {
    %c0 = arith.constant 0 : index
    %c0_0 = arith.constant 0 : index
    %c0_1 = arith.constant 0 : index
    %c0_2 = arith.constant 0 : index
    %0 = vector.load %arg1[%c0, %c0_0, %c0_1, %c0_2] : memref<1x16x16x128xf32, #tpu.memory_space<vmem>>, vector<1x16x16x128xf32>
    %1 = vector.shape_cast %0 : vector<1x16x16x128xf32> to vector<16x16x128xf32>
    %cst = arith.constant dense<0.000000e+00> : vector<128xf32>
    %2 = vector.multi_reduction <add>, %1, %cst [0, 1] : vector<16x16x128xf32> to vector<128xf32>
    %3 = vector.shape_cast %2 : vector<128xf32> to vector<1x1x128xf32>
    %4 = vector.shape_cast %3 : vector<1x1x128xf32> to vector<1x128xf32>
    %cst_3 = arith.constant 3.906250e-03 : f32
    %5 = vector.broadcast %cst_3 : f32 to vector<1x128xf32>
    %6 = arith.mulf %4, %5 : vector<1x128xf32>
    %c0_4 = arith.constant 0 : index
    %c0_5 = arith.constant 0 : index
    %7 = vector.load %arg2[%c0_4, %c0_5] : memref<128x16xf32, #tpu.memory_space<vmem>>, vector<128x16xf32>
    %cst_6 = arith.constant dense<0.000000e+00> : vector<1x16xf32>
    %8 = tpu.matmul %6, %7, %cst_6 {dimension_numbers = #tpu.dot_dimension_numbers<[1], [0], [0], [1], [0, 0, 1, 1], [], []>} : vector<1x128xf32>, vector<128x16xf32>, vector<1x16xf32> -> vector<1x16xf32>
    %c0_7 = arith.constant 0 : index
    %c0_8 = arith.constant 0 : index
    %9 = vector.load %arg3[%c0_7, %c0_8] : memref<1x16xf32, #tpu.memory_space<vmem>>, vector<1x16xf32>
    %10 = arith.addf %8, %9 : vector<1x16xf32>
    %cst_9 = arith.constant 0.000000e+00 : f32
    %11 = vector.broadcast %cst_9 : f32 to vector<1x16xf32>
    %12 = arith.maximumf %10, %11 : vector<1x16xf32>
    %c0_10 = arith.constant 0 : index
    %c0_11 = arith.constant 0 : index
    %13 = vector.load %arg4[%c0_10, %c0_11] : memref<16x128xf32, #tpu.memory_space<vmem>>, vector<16x128xf32>
    %cst_12 = arith.constant dense<0.000000e+00> : vector<1x128xf32>
    %14 = tpu.matmul %12, %13, %cst_12 {dimension_numbers = #tpu.dot_dimension_numbers<[1], [0], [0], [1], [0, 0, 1, 1], [], []>} : vector<1x16xf32>, vector<16x128xf32>, vector<1x128xf32> -> vector<1x128xf32>
    %c0_13 = arith.constant 0 : index
    %c0_14 = arith.constant 0 : index
    %15 = vector.load %arg5[%c0_13, %c0_14] : memref<1x128xf32, #tpu.memory_space<vmem>>, vector<1x128xf32>
    %16 = arith.addf %14, %15 : vector<1x128xf32>
    %17 = arith.negf %16 : vector<1x128xf32>
    %18 = math.exp %17 : vector<1x128xf32>
    %cst_15 = arith.constant 1.000000e+00 : f32
    %19 = vector.broadcast %cst_15 : f32 to vector<1x128xf32>
    %20 = arith.addf %19, %18 : vector<1x128xf32>
    %21 = arith.divf %19, %20 : vector<1x128xf32>
    %22 = vector.shape_cast %21 : vector<1x128xf32> to vector<128xf32>
    %23 = vector.shape_cast %22 : vector<128xf32> to vector<1x1x128xf32>
    %24 = vector.broadcast %23 : vector<1x1x128xf32> to vector<16x16x128xf32>
    %25 = arith.mulf %1, %24 : vector<16x16x128xf32>
    %c0_16 = arith.constant 0 : index
    %c0_17 = arith.constant 0 : index
    %c0_18 = arith.constant 0 : index
    %c0_19 = arith.constant 0 : index
    %26 = vector.load %arg6[%c0_16, %c0_17, %c0_18, %c0_19] : memref<1x16x16x128xf32, #tpu.memory_space<vmem>>, vector<1x16x16x128xf32>
    %27 = vector.shape_cast %26 : vector<1x16x16x128xf32> to vector<16x16x128xf32>
    %28 = vector.shape_cast %25 : vector<16x16x128xf32> to vector<1x16x16x128xf32>
    tpu.vector_store %arg6[%c0_16, %c0_17, %c0_18, %c0_19], %28 {strides = array<i32>} : memref<1x16x16x128xf32, #tpu.memory_space<vmem>>, vector<1x16x16x128xf32>,
    return
  }
  func.func @transform_0(%arg0: i32) -> (i32, i32, i32, i32) {
    %c0_i32 = arith.constant 0 : i32
    %c0_i32_0 = arith.constant 0 : i32
    %c0_i32_1 = arith.constant 0 : i32
    %c0_i32_2 = arith.constant 0 : i32
    return %arg0, %c0_i32, %c0_i32_0, %c0_i32_1 : i32, i32, i32, i32
  }
  func.func @transform_1(%arg0: i32) -> (i32, i32) {
    %c0_i32 = arith.constant 0 : i32
    %c0_i32_0 = arith.constant 0 : i32
    %c0_i32_1 = arith.constant 0 : i32
    return %c0_i32, %c0_i32_0 : i32, i32
  }
  func.func @transform_2(%arg0: i32) -> (i32, i32) {
    %c0_i32 = arith.constant 0 : i32
    %c0_i32_0 = arith.constant 0 : i32
    %c0_i32_1 = arith.constant 0 : i32
    return %c0_i32, %c0_i32_0 : i32, i32
  }
  func.func @transform_3(%arg0: i32) -> (i32, i32) {
    %c0_i32 = arith.constant 0 : i32
    %c0_i32_0 = arith.constant 0 : i32
    %c0_i32_1 = arith.constant 0 : i32
    return %c0_i32, %c0_i32_0 : i32, i32
  }
  func.func @transform_4(%arg0: i32) -> (i32, i32) {
    %c0_i32 = arith.constant 0 : i32
    %c0_i32_0 = arith.constant 0 : i32
    %c0_i32_1 = arith.constant 0 : i32
    return %c0_i32, %c0_i32_0 : i32, i32
  }
  func.func @transform_5(%arg0: i32) -> (i32, i32, i32, i32) {
    %c0_i32 = arith.constant 0 : i32
    %c0_i32_0 = arith.constant 0 : i32
    %c0_i32_1 = arith.constant 0 : i32
    %c0_i32_2 = arith.constant 0 : i32
    return %arg0, %c0_i32, %c0_i32_0, %c0_i32_1 : i32, i32, i32, i32
  }
}

</mosaic_0001>

<llo_original>
// kernel: squeeze_excitation.1
$region0: #{squeeze_excitation.1}
  #allocation0 [shape = 'u32[]', space=smem, size = 0x4, offset = 0x4, fixed_abs, tag = 'smem constant byte address 0x4 - core index']
  #allocation1 [shape = 'u32[72,128]{1,0:T(1,128)}', space=vmem, size = 0x9000, scoped, tag = 'internal scratch']
  %s0 = inlined_call_operand.hbm [shape: f32[2,16,16,128], index: 0, kind: input, shape index: {}]
  %s1 = inlined_call_operand.vmem [shape: f32[128,16], index: 1, kind: input, shape index: {}]
  %s2 = inlined_call_operand.vmem [shape: f32[1,16], index: 2, kind: input, shape index: {}]
  %s3 = inlined_call_operand.vmem [shape: f32[16,128], index: 3, kind: input, shape index: {}]
  %s4 = inlined_call_operand.vmem [shape: f32[1,128], index: 4, kind: input, shape index: {}]
  %s5 = inlined_call_operand.hbm [shape: f32[2,16,16,128], index: 5, kind: output, shape index: {}]
  %s6 = sld [smem:[#allocation0]]
  $region57: #{squeeze_excitation.1} parent=0
    _
  %s8 = ssub.s32 1, %s6
  %s9 = scalar_select 0, %s8, %s6
  $region1: #{squeeze_excitation.1} parent=0
    #allocation2 [shape = 'u8[262144]{0}', space=vmem, size = 0x40000, scoped, tag = 'input window, operand 0']
    #allocation3 [shape = 's32[2]{0}', space=sflag, size = 0x8, scoped, tag = 'scoped memory for squeeze_excitation.1']
    #allocation4 [shape = 's32[2]{0}', space=sflag, size = 0x8, scoped, tag = 'scoped memory for squeeze_excitation.1']
    #allocation5 [shape = 'u8[262144]{0}', space=vmem, size = 0x40000, scoped, tag = 'output window, operand 0']
    %10 = vsyncpa [#allocation3], 0
    %s11 = scalar_lea.sflag [#allocation3], 1
    %12 = vsyncpa %s11, 0
    %13 = vsyncpa [#allocation4], 0
    %s14 = scalar_lea.sflag [#allocation4], 1
    %15 = vsyncpa %s14, 0
    loop: start=0, step=1, limit=4
    $region2: #{squeeze_excitation.1} parent=1 // loop_pre_header
      _
    $region3: #{squeeze_excitation.1} parent=1 // loop_header
      %s17 = sphi 0, %s21
      %p18 = scmp.ge.s32.totalorder %s17, 4
      %s27 = sphi 0, %s29
      %s30 = sphi 0, %s27
      %s31 = sphi 0, %s30
      %s47 = sphi 0, %s31
      %s51 = sphi 0, %s51
      %s53 = sphi 0, %s51
      %s54 = sphi 0, %s53
      %s68 = sphi 0, %s54
      %s72 = sphi 0, %s72
      %s74 = sphi 0, %s72
      %s75 = sphi 0, %s74
      %s89 = sphi 0, %s75
      %s93 = sphi 0, %s93
      %s95 = sphi 0, %s93
      %s96 = sphi 0, %s95
      %s110 = sphi 0, %s96
      %s114 = sphi 0, %s114
      %s116 = sphi 0, %s114
      %s117 = sphi 0, %s116
      %s131 = sphi 0, %s117
      %s137 = sphi 0, %s139
      %s140 = sphi 0, %s137
      %s141 = sphi 0, %s140
      %s157 = sphi 0, %s141
    $region4: #{squeeze_excitation.1} parent=1 // loop_header_branch
      %20 = sbr.rel (%p18) target = $region8
    $region5: #{squeeze_excitation.1} parent=1 // loop_body
      %s22 = ssub.s32 %s17, 1
      %s23 = ssub.s32 %s17, 2
      %s24 = sadd.s32 %s17, 1
      %s25 = ssub.s32 %s17, %s24
      %p26 = scmp.eq.s32.totalorder %s25, 0
      %s28 = sadd.s32 %s27, 1
      %s29 = scalar_select %p26, %s27, %s28
      %p32 = pneg %p26
      %p33 = scmp.eq.s32.totalorder %s17, 1
      %p34 = por %p32, %p33
      %p35 = scmp.ne.s32.totalorder %s27, %s30
      %p36 = scmp.eq.s32.totalorder %s17, 0
      %p37 = por %p35, %p36
      %p38 = scmp.ne.s32.totalorder %s27, %s30
      %p39 = scmp.eq.s32.totalorder %s22, 1
      %p40 = por %p38, %p39
      %p41 = scmp.ne.s32.totalorder %s30, %s31
      %p42 = scmp.eq.s32.totalorder %s22, 0
      %p43 = por %p41, %p42
      %p44 = scmp.ne.s32.totalorder %s30, %s31
      %p45 = scmp.eq.s32.totalorder %s23, 1
      %p46 = por %p44, %p45
      %p48 = scmp.ne.s32.totalorder %s31, %s47
      %p49 = scmp.eq.s32.totalorder %s23, 0
      %p50 = por %p48, %p49
      %s52 = sadd.s32 %s51, 1
      %p55 = scmp.eq.s32.totalorder %s17, 1
      %p56 = scmp.ne.s32.totalorder %s51, %s53
      %p57 = scmp.eq.s32.totalorder %s17, 0
      %p58 = por %p56, %p57
      %p59 = scmp.ne.s32.totalorder %s51, %s53
      %p60 = scmp.eq.s32.totalorder %s22, 1
      %p61 = por %p59, %p60
      %p62 = scmp.ne.s32.totalorder %s53, %s54
      %p63 = scmp.eq.s32.totalorder %s22, 0
      %p64 = por %p62, %p63
      %p65 = scmp.ne.s32.totalorder %s53, %s54
      %p66 = scmp.eq.s32.totalorder %s23, 1
      %p67 = por %p65, %p66
      %p69 = scmp.ne.s32.totalorder %s54, %s68
      %p70 = scmp.eq.s32.totalorder %s23, 0
      %p71 = por %p69, %p70
      %s73 = sadd.s32 %s72, 1
      %p76 = scmp.eq.s32.totalorder %s17, 1
      %p77 = scmp.ne.s32.totalorder %s72, %s74
      %p78 = scmp.eq.s32.totalorder %s17, 0
      %p79 = por %p77, %p78
      %p80 = scmp.ne.s32.totalorder %s72, %s74
      %p81 = scmp.eq.s32.totalorder %s22, 1
      %p82 = por %p80, %p81
      %p83 = scmp.ne.s32.totalorder %s74, %s75
      %p84 = scmp.eq.s32.totalorder %s22, 0
      %p85 = por %p83, %p84
      %p86 = scmp.ne.s32.totalorder %s74, %s75
      %p87 = scmp.eq.s32.totalorder %s23, 1
      %p88 = por %p86, %p87
      %p90 = scmp.ne.s32.totalorder %s75, %s89
      %p91 = scmp.eq.s32.totalorder %s23, 0
      %p92 = por %p90, %p91
      %s94 = sadd.s32 %s93, 1
      %p97 = scmp.eq.s32.totalorder %s17, 1
      %p98 = scmp.ne.s32.totalorder %s93, %s95
      %p99 = scmp.eq.s32.totalorder %s17, 0
      %p100 = por %p98, %p99
      %p101 = scmp.ne.s32.totalorder %s93, %s95
      %p102 = scmp.eq.s32.totalorder %s22, 1
      %p103 = por %p101, %p102
      %p104 = scmp.ne.s32.totalorder %s95, %s96
      %p105 = scmp.eq.s32.totalorder %s22, 0
      %p106 = por %p104, %p105
      %p107 = scmp.ne.s32.totalorder %s95, %s96
      %p108 = scmp.eq.s32.totalorder %s23, 1
      %p109 = por %p107, %p108
      %p111 = scmp.ne.s32.totalorder %s96, %s110
      %p112 = scmp.eq.s32.totalorder %s23, 0
      %p113 = por %p111, %p112
      %s115 = sadd.s32 %s114, 1
      %p118 = scmp.eq.s32.totalorder %s17, 1
      %p119 = scmp.ne.s32.totalorder %s114, %s116
      %p120 = scmp.eq.s32.totalorder %s17, 0
      %p121 = por %p119, %p120
      %p122 = scmp.ne.s32.totalorder %s114, %s116
      %p123 = scmp.eq.s32.totalorder %s22, 1
      %p124 = por %p122, %p123
      %p125 = scmp.ne.s32.totalorder %s116, %s117
      %p126 = scmp.eq.s32.totalorder %s22, 0
      %p127 = por %p125, %p126
      %p128 = scmp.ne.s32.totalorder %s116, %s117
      %p129 = scmp.eq.s32.totalorder %s23, 1
      %p130 = por %p128, %p129
      %p132 = scmp.ne.s32.totalorder %s117, %s131
      %p133 = scmp.eq.s32.totalorder %s23, 0
      %p134 = por %p132, %p133
      %s135 = ssub.s32 %s17, %s24
      %p136 = scmp.eq.s32.totalorder %s135, 0
      %s138 = sadd.s32 %s137, 1
      %s139 = scalar_select %p136, %s137, %s138
      %p142 = pneg %p136
      %p143 = scmp.eq.s32.totalorder %s17, 1
      %p144 = por %p142, %p143
      %p145 = scmp.ne.s32.totalorder %s137, %s140
      %p146 = scmp.eq.s32.totalorder %s17, 0
      %p147 = por %p145, %p146
      %p148 = scmp.ne.s32.totalorder %s137, %s140
      %p149 = scmp.eq.s32.totalorder %s22, 1
      %p150 = por %p148, %p149
      %p151 = scmp.ne.s32.totalorder %s140, %s141
      %p152 = scmp.eq.s32.totalorder %s22, 0
      %p153 = por %p151, %p152
      %p154 = scmp.ne.s32.totalorder %s140, %s141
      %p155 = scmp.eq.s32.totalorder %s23, 1
      %p156 = por %p154, %p155
      %p158 = scmp.ne.s32.totalorder %s141, %s157
      %p159 = scmp.eq.s32.totalorder %s23, 0
      %p160 = por %p158, %p159
      %p161 = scmp.le.s32.totalorder 1, %s17
      %p162 = scmp.lt.s32.totalorder %s17, 3
      %p163 = pnand %p161, %p162
      %p164 = pneg %p163
      // Predicated region
      $region9: #{squeeze_excitation.1} parent=5 // pred_check
        _
      $region10: #{squeeze_excitation.1} parent=5 // pred_check_branch
        %166 = sbr.rel (%p163) target = $region12
      $region11: #{squeeze_excitation.1} parent=5 // pred_region
        %s167 = ssub.s32 %s17, 1
        // Predicated region
        $region13: #{squeeze_excitation.1} parent=11 // pred_check
          %p168 = pneg %p64
        $region14: #{squeeze_excitation.1} parent=11 // pred_check_branch
          %170 = sbr.rel (%p168) target = $region16
        $region15: #{squeeze_excitation.1} parent=11 // pred_region
          _
        $region16: #{squeeze_excitation.1} parent=11 // pred_fallthru
          _
        // Predicated region
        $region17: #{squeeze_excitation.1} parent=11 // pred_check
          %p171 = pneg %p85
        $region18: #{squeeze_excitation.1} parent=11 // pred_check_branch
          %173 = sbr.rel (%p171) target = $region20
        $region19: #{squeeze_excitation.1} parent=11 // pred_region
          _
        $region20: #{squeeze_excitation.1} parent=11 // pred_fallthru
          _
        // Predicated region
        $region21: #{squeeze_excitation.1} parent=11 // pred_check
          %p174 = pneg %p106
        $region22: #{squeeze_excitation.1} parent=11 // pred_check_branch
          %176 = sbr.rel (%p174) target = $region24
        $region23: #{squeeze_excitation.1} parent=11 // pred_region
          _
        $region24: #{squeeze_excitation.1} parent=11 // pred_fallthru
          _
        // Predicated region
        $region25: #{squeeze_excitation.1} parent=11 // pred_check
          %p177 = pneg %p127
        $region26: #{squeeze_excitation.1} parent=11 // pred_check_branch
          %179 = sbr.rel (%p177) target = $region28
        $region27: #{squeeze_excitation.1} parent=11 // pred_region
          _
        $region28: #{squeeze_excitation.1} parent=11 // pred_fallthru
          _
      $region12: #{squeeze_excitation.1} parent=5 // pred_fallthru
        _
      %p180 = scmp.lt.s32.totalorder %s17, 2
      // Predicated region
      $region29: #{squeeze_excitation.1} parent=5 // pred_check
        %p181 = pneg %p180
      $region30: #{squeeze_excitation.1} parent=5 // pred_check_branch
        %183 = sbr.rel (%p181) target = $region32
      $region31: #{squeeze_excitation.1} parent=5 // pred_region
        // Predicated region
        $region33: #{squeeze_excitation.1} parent=31 // pred_check
          %p184 = pneg %p37
        $region34: #{squeeze_excitation.1} parent=31 // pred_check_branch
          %186 = sbr.rel (%p184) target = $region36
        $region35: #{squeeze_excitation.1} parent=31 // pred_region
          %s187 = sand.u32 %s27, 1
          %s188 = scalar_lea.sflag [#allocation3], %s187
          %s189 = sand.u32 %s27, 1
          %s190 = smul.addr %s189, 256
          %s191 = scalar_lea.vmem [#allocation2], %s190
          %193 = vsyncadd %s188, 0
          %s194 = smul.addr %s17, 32
          %s195 = smul.addr %s194, 8
          %s196 = scalar_lea.hbm %s0, %s195
          %s197 = sshll.u32 %s196, 4
          %s198 = int_to_ptr.hbm [resolvable:$true] %s197
          %s199 = sshll.u32 %s191, 4
          %s200 = int_to_ptr.vmem [resolvable:$true] %s199
          %205 = dma.hbm_to_vmem [thread:$0]  %s198, 4096, %s200, %s188, 128, 128, 8
        $region36: #{squeeze_excitation.1} parent=31 // pred_fallthru
          _
      $region32: #{squeeze_excitation.1} parent=5 // pred_fallthru
        _
      %p206 = scmp.le.s32.totalorder 1, %s17
      %p207 = scmp.lt.s32.totalorder %s17, 3
      %p208 = pnand %p206, %p207
      %p209 = pneg %p208
      // Predicated region
      $region37: #{squeeze_excitation.1} parent=5 // pred_check
        _
      $region38: #{squeeze_excitation.1} parent=5 // pred_check_branch
        %211 = sbr.rel (%p208) target = $region40
      $region39: #{squeeze_excitation.1} parent=5 // pred_region
        %s212 = ssub.s32 %s17, 1
        %s213 = sand.u32 %s30, 1
        %s214 = scalar_lea.sflag [#allocation3], %s213
        %s215 = sand.u32 %s30, 1
        %s216 = smul.addr %s215, 256
        %s217 = scalar_lea.vmem [#allocation2], %s216
        // Predicated region
        $region41: #{squeeze_excitation.1} parent=39 // pred_check
          %p218 = pneg %p43
        $region42: #{squeeze_excitation.1} parent=39 // pred_check_branch
          %220 = sbr.rel (%p218) target = $region44
        $region43: #{squeeze_excitation.1} parent=39 // pred_region
          %222 = dma.done %s214, 4096
        $region44: #{squeeze_excitation.1} parent=39 // pred_fallthru
          _
        %s223 = sand.u32 %s30, 1
        %s224 = scalar_lea.sflag [#allocation3], %s223
        %s225 = sand.u32 %s30, 1
        %s226 = smul.addr %s225, 256
        %s227 = scalar_lea.vmem [#allocation2], %s226
        %p228 = pneg %p43
        %p229 = pneg %p40
        %p230 = pneg %p64
        %p231 = pneg %p61
        %p232 = pneg %p85
        %p233 = pneg %p82
        %p234 = pneg %p106
        %p235 = pneg %p103
        %p236 = pneg %p127
        %p237 = pneg %p124
        %p238 = pneg %p153
        %p239 = pneg %p150
        %s240 = sand.u32 %s140, 1
        %s241 = scalar_lea.sflag [#allocation4], %s240
        %s242 = sand.u32 %s140, 1
        %s243 = smul.addr %s242, 256
        %s244 = scalar_lea.vmem [#allocation5], %s243
        %v245 = vld [vmem:[%s217] sm:$0xff]
        %v246 = vld [vmem:[%s217 + $0x8] sm:$0xff]
        %v247 = vld [vmem:[%s217 + $0x10] sm:$0xff]
        %v248 = vld [vmem:[%s217 + $0x18] sm:$0xff]
        %v249 = vld [vmem:[%s217 + $0x20] sm:$0xff]
        %v250 = vld [vmem:[%s217 + $0x28] sm:$0xff]
        %v251 = vld [vmem:[%s217 + $0x30] sm:$0xff]
        %v252 = vld [vmem:[%s217 + $0x38] sm:$0xff]
        %v253 = vld [vmem:[%s217 + $0x40] sm:$0xff]
        %v254 = vld [vmem:[%s217 + $0x48] sm:$0xff]
        %v255 = vld [vmem:[%s217 + $0x50] sm:$0xff]
        %v256 = vld [vmem:[%s217 + $0x58] sm:$0xff]
        %v257 = vld [vmem:[%s217 + $0x60] sm:$0xff]
        %v258 = vld [vmem:[%s217 + $0x68] sm:$0xff]
        %v259 = vld [vmem:[%s217 + $0x70] sm:$0xff]
        %v260 = vld [vmem:[%s217 + $0x78] sm:$0xff]
        %v261 = vld [vmem:[%s217 + $0x80] sm:$0xff]
        %v262 = vld [vmem:[%s217 + $0x88] sm:$0xff]
        %v263 = vld [vmem:[%s217 + $0x90] sm:$0xff]
        %v264 = vld [vmem:[%s217 + $0x98] sm:$0xff]
        %v265 = vld [vmem:[%s217 + $0xa0] sm:$0xff]
        %v266 = vld [vmem:[%s217 + $0xa8] sm:$0xff]
        %v267 = vld [vmem:[%s217 + $0xb0] sm:$0xff]
        %v268 = vld [vmem:[%s217 + $0xb8] sm:$0xff]
        %v269 = vld [vmem:[%s217 + $0xc0] sm:$0xff]
        %v270 = vld [vmem:[%s217 + $0xc8] sm:$0xff]
        %v271 = vld [vmem:[%s217 + $0xd0] sm:$0xff]
        %v272 = vld [vmem:[%s217 + $0xd8] sm:$0xff]
        %v273 = vld [vmem:[%s217 + $0xe0] sm:$0xff]
        %v274 = vld [vmem:[%s217 + $0xe8] sm:$0xff]
        %v275 = vld [vmem:[%s217 + $0xf0] sm:$0xff]
        %v276 = vld [vmem:[%s217 + $0xf8] sm:$0xff]
        %v277 = vadd.f32 %v245, %v246
        %v278 = vadd.f32 %v277, %v247
        %v279 = vadd.f32 %v278, %v248
        %v280 = vadd.f32 %v279, %v249
        %v281 = vadd.f32 %v280, %v250
        %v282 = vadd.f32 %v281, %v251
        %v283 = vadd.f32 %v282, %v252
        %v284 = vadd.f32 %v283, %v253
        %v285 = vadd.f32 %v284, %v254
        %v286 = vadd.f32 %v285, %v255
        %v287 = vadd.f32 %v286, %v256
        %v288 = vadd.f32 %v287, %v257
        %v289 = vadd.f32 %v288, %v258
        %v290 = vadd.f32 %v289, %v259
        %v291 = vadd.f32 %v290, %v260
        %v292 = vadd.f32 %v291, %v261
        %v293 = vadd.f32 %v292, %v262
        %v294 = vadd.f32 %v293, %v263
        %v295 = vadd.f32 %v294, %v264
        %v296 = vadd.f32 %v295, %v265
        %v297 = vadd.f32 %v296, %v266
        %v298 = vadd.f32 %v297, %v267
        %v299 = vadd.f32 %v298, %v268
        %v300 = vadd.f32 %v299, %v269
        %v301 = vadd.f32 %v300, %v270
        %v302 = vadd.f32 %v301, %v271
        %v303 = vadd.f32 %v302, %v272
        %v304 = vadd.f32 %v303, %v273
        %v305 = vadd.f32 %v304, %v274
        %v306 = vadd.f32 %v305, %v275
        %v307 = vadd.f32 %v306, %v276
        %v308 = vrot.slane %v307, 4
        %v309 = vadd.f32 %v307, %v308
        %v310 = vrot.slane %v309, 2
        %v311 = vadd.f32 %v309, %v310
        %v312 = vrot.slane %v311, 1
        %v313 = vadd.f32 %v311, %v312
        %v314 = vmul.f32 %v313, 0.00390625
        %v315 = vld [vmem:[%s1] sm:$0xff]
        %v316 = vld [vmem:[%s1 + $0x8] sm:$0xff]
        %v317 = vld [vmem:[%s1 + $0x10] sm:$0xff]
        %v318 = vld [vmem:[%s1 + $0x18] sm:$0xff]
        %v319 = vld [vmem:[%s1 + $0x20] sm:$0xff]
        %v320 = vld [vmem:[%s1 + $0x28] sm:$0xff]
        %v321 = vld [vmem:[%s1 + $0x30] sm:$0xff]
        %v322 = vld [vmem:[%s1 + $0x38] sm:$0xff]
        %v323 = vld [vmem:[%s1 + $0x40] sm:$0xff]
        %v324 = vld [vmem:[%s1 + $0x48] sm:$0xff]
        %v325 = vld [vmem:[%s1 + $0x50] sm:$0xff]
        %v326 = vld [vmem:[%s1 + $0x58] sm:$0xff]
        %v327 = vld [vmem:[%s1 + $0x60] sm:$0xff]
        %v328 = vld [vmem:[%s1 + $0x68] sm:$0xff]
        %v329 = vld [vmem:[%s1 + $0x70] sm:$0xff]
        %v330 = vld [vmem:[%s1 + $0x78] sm:$0xff]
        %v331 = vld [vmem:[%s2] sm:$0x1]
        %332 = vmatpush.msra.mxu0 %v330
        %333 = vmatpush.msra.mxu0 %v329
        %334 = vmatpush.msra.mxu0 %v328
        %335 = vmatpush.msra.mxu0 %v327
        %336 = vmatpush.msra.mxu0 %v326
        %337 = vmatpush.msra.mxu0 %v325
        %338 = vmatpush.msra.mxu0 %v324
        %339 = vmatpush.msra.mxu0 %v323
        %340 = vmatpush.msra.mxu0 %v322
        %341 = vmatpush.msra.mxu0 %v321
        %342 = vmatpush.msra.mxu0 %v320
        %343 = vmatpush.msra.mxu0 %v319
        %344 = vmatpush.msra.mxu0 %v318
        %345 = vmatpush.msra.mxu0 %v317
        %346 = vmatpush.msra.mxu0 %v316
        %347 = vmatpush.msra.mxu0 %v315
        %348 = vmatmul.f32.gmra.mxu0 %v314
        %v349 = vpop.f32.mrf.mxu0
        %v350 = vadd.f32 %v331, %v349
        %351 = vdwg.mxu0
        %v352 = vmax.f32 %v350, 0.0
        %v353 = vld [vmem:[%s3] sm:$0xff]
        %v354 = vld [vmem:[%s3 + $0x8] sm:$0xff]
        %v355 = vld [vmem:[%s4] sm:$0x1]
        %vm356 = vcmask 130048
        %v358 = vsel %vm356, %v352, 0
        %360 = vmatpush.msra.mxu0 0.0
        %361 = vmatpush.msra.mxu0 0.0
        %362 = vmatpush.msra.mxu0 0.0
        %363 = vmatpush.msra.mxu0 0.0
        %364 = vmatpush.msra.mxu0 0.0
        %365 = vmatpush.msra.mxu0 0.0
        %366 = vmatpush.msra.mxu0 0.0
        %367 = vmatpush.msra.mxu0 0.0
        %368 = vmatpush.msra.mxu0 0.0
        %369 = vmatpush.msra.mxu0 0.0
        %370 = vmatpush.msra.mxu0 0.0
        %371 = vmatpush.msra.mxu0 0.0
        %372 = vmatpush.msra.mxu0 0.0
        %373 = vmatpush.msra.mxu0 0.0
        %374 = vmatpush.msra.mxu0 %v354
        %375 = vmatpush.msra.mxu0 %v353
        %376 = vmatmul.f32.gmra.mxu0 %v358
        %v377 = vpop.f32.mrf.mxu0
        %v378 = vadd.f32 %v355, %v377
        %379 = vdwg.mxu0
        %v380 = vxor.u32 %v378, 2147483648
        %v381 = vmul.f32 %v380, 1.442695
        %v382 = vpow.pop %v381
        %v383 = vadd.f32 %v382, 1.0
        %v384 = vrcp.pop %v383
        %v385 = vmul.f32 %v383, %v384
        %v386 = vsub.f32 1.0, %v385
        %v387 = vmul.f32 %v384, %v386
        %v388 = vadd.f32 %v384, %v387
        %vm389 = vweird.f32 %v383
        %vm390 = vweird.f32 %v384
        %vm391 = vmor %vm389, %vm390
        %v392 = vsel %vm391, %v384, %v388
        %v393 = vand.u32 2147483647, %v383
        %vm394 = vcmp.eq.f32.partialorder %v393, 8.507059e+37
        %v395 = vand.u32 %v383, 2147483648
        %v396 = vor.u32 1.1754944e-38, %v395
        %v397 = vsel %vm394, %v396, %v392
        %v398 = vmul.f32 1.0, %v397
        %v399 = vperm.slane %v398, 0
        %v400 = vmul.f32 %v245, %v399
        %v401 = vmul.f32 %v246, %v399
        %v402 = vmul.f32 %v247, %v399
        %v403 = vmul.f32 %v248, %v399
        %v404 = vmul.f32 %v249, %v399
        %v405 = vmul.f32 %v250, %v399
        %v406 = vmul.f32 %v251, %v399
        %v407 = vmul.f32 %v252, %v399
        %v408 = vmul.f32 %v253, %v399
        %v409 = vmul.f32 %v254, %v399
        %v410 = vmul.f32 %v255, %v399
        %v411 = vmul.f32 %v256, %v399
        %v412 = vmul.f32 %v257, %v399
        %v413 = vmul.f32 %v258, %v399
        %v414 = vmul.f32 %v259, %v399
        %v415 = vmul.f32 %v260, %v399
        %v416 = vmul.f32 %v261, %v399
        %v417 = vmul.f32 %v262, %v399
        %v418 = vmul.f32 %v263, %v399
        %v419 = vmul.f32 %v264, %v399
        %v420 = vmul.f32 %v265, %v399
        %v421 = vmul.f32 %v266, %v399
        %v422 = vmul.f32 %v267, %v399
        %v423 = vmul.f32 %v268, %v399
        %v424 = vmul.f32 %v269, %v399
        %v425 = vmul.f32 %v270, %v399
        %v426 = vmul.f32 %v271, %v399
        %v427 = vmul.f32 %v272, %v399
        %v428 = vmul.f32 %v273, %v399
        %v429 = vmul.f32 %v274, %v399
        %v430 = vmul.f32 %v275, %v399
        %v431 = vmul.f32 %v276, %v399
        %432 = vst [vmem:[%s244] sm:$0xff] %v400
        %433 = vst [vmem:[%s244 + $0x8] sm:$0xff] %v401
        %434 = vst [vmem:[%s244 + $0x10] sm:$0xff] %v402
        %435 = vst [vmem:[%s244 + $0x18] sm:$0xff] %v403
        %436 = vst [vmem:[%s244 + $0x20] sm:$0xff] %v404
        %437 = vst [vmem:[%s244 + $0x28] sm:$0xff] %v405
        %438 = vst [vmem:[%s244 + $0x30] sm:$0xff] %v406
        %439 = vst [vmem:[%s244 + $0x38] sm:$0xff] %v407
        %440 = vst [vmem:[%s244 + $0x40] sm:$0xff] %v408
        %441 = vst [vmem:[%s244 + $0x48] sm:$0xff] %v409
        %442 = vst [vmem:[%s244 + $0x50] sm:$0xff] %v410
        %443 = vst [vmem:[%s244 + $0x58] sm:$0xff] %v411
        %444 = vst [vmem:[%s244 + $0x60] sm:$0xff] %v412
        %445 = vst [vmem:[%s244 + $0x68] sm:$0xff] %v413
        %446 = vst [vmem:[%s244 + $0x70] sm:$0xff] %v414
        %447 = vst [vmem:[%s244 + $0x78] sm:$0xff] %v415
        %448 = vst [vmem:[%s244 + $0x80] sm:$0xff] %v416
        %449 = vst [vmem:[%s244 + $0x88] sm:$0xff] %v417
        %450 = vst [vmem:[%s244 + $0x90] sm:$0xff] %v418
        %451 = vst [vmem:[%s244 + $0x98] sm:$0xff] %v419
        %452 = vst [vmem:[%s244 + $0xa0] sm:$0xff] %v420
        %453 = vst [vmem:[%s244 + $0xa8] sm:$0xff] %v421
        %454 = vst [vmem:[%s244 + $0xb0] sm:$0xff] %v422
        %455 = vst [vmem:[%s244 + $0xb8] sm:$0xff] %v423
        %456 = vst [vmem:[%s244 + $0xc0] sm:$0xff] %v424
        %457 = vst [vmem:[%s244 + $0xc8] sm:$0xff] %v425
        %458 = vst [vmem:[%s244 + $0xd0] sm:$0xff] %v426
        %459 = vst [vmem:[%s244 + $0xd8] sm:$0xff] %v427
        %460 = vst [vmem:[%s244 + $0xe0] sm:$0xff] %v428
        %461 = vst [vmem:[%s244 + $0xe8] sm:$0xff] %v429
        %462 = vst [vmem:[%s244 + $0xf0] sm:$0xff] %v430
        %463 = vst [vmem:[%s244 + $0xf8] sm:$0xff] %v431
        %s464 = sand.u32 %s140, 1
        %s465 = scalar_lea.sflag [#allocation4], %s464
        %s466 = sand.u32 %s140, 1
        %s467 = smul.addr %s466, 256
        %s468 = scalar_lea.vmem [#allocation5], %s467
        // Predicated region
        $region45: #{squeeze_excitation.1} parent=39 // pred_check
          %p469 = pneg %p150
        $region46: #{squeeze_excitation.1} parent=39 // pred_check_branch
          %471 = sbr.rel (%p469) target = $region48
        $region47: #{squeeze_excitation.1} parent=39 // pred_region
          %473 = vsyncadd %s465, 0
          %s474 = smul.addr %s22, 32
          %s475 = smul.addr %s474, 8
          %s476 = scalar_lea.hbm %s5, %s475
          %s477 = sshll.u32 %s468, 4
          %s478 = int_to_ptr.vmem [resolvable:$true] %s477
          %s479 = sshll.u32 %s476, 4
          %s480 = int_to_ptr.hbm [resolvable:$true] %s479
          %485 = dma.vmem_to_hbm [thread:$0]  %s478, 4096, %s480, %s465, 128, 128, 8
        $region48: #{squeeze_excitation.1} parent=39 // pred_fallthru
          _
      $region40: #{squeeze_excitation.1} parent=5 // pred_fallthru
        _
      %p486 = scmp.le.s32.totalorder 2, %s17
      // Predicated region
      $region49: #{squeeze_excitation.1} parent=5 // pred_check
        %p487 = pneg %p486
      $region50: #{squeeze_excitation.1} parent=5 // pred_check_branch
        %489 = sbr.rel (%p487) target = $region52
      $region51: #{squeeze_excitation.1} parent=5 // pred_region
        %s490 = ssub.s32 %s17, 2
        // Predicated region
        $region53: #{squeeze_excitation.1} parent=51 // pred_check
          %p491 = pneg %p156
        $region54: #{squeeze_excitation.1} parent=51 // pred_check_branch
          %493 = sbr.rel (%p491) target = $region56
        $region55: #{squeeze_excitation.1} parent=51 // pred_region
          %s494 = sand.u32 %s141, 1
          %s495 = scalar_lea.sflag [#allocation4], %s494
          %s496 = sand.u32 %s141, 1
          %s497 = smul.addr %s496, 256
          %s498 = scalar_lea.vmem [#allocation5], %s497
          %500 = dma.done %s495, 4096
        $region56: #{squeeze_excitation.1} parent=51 // pred_fallthru
          _
      $region52: #{squeeze_excitation.1} parent=5 // pred_fallthru
        _
    $region6: #{squeeze_excitation.1} parent=1 // loop_footer
      %s21 = sadd.s32 1, %s17
    $region7: #{squeeze_excitation.1} parent=1 // loop_footer_branch
      %16 = sbr.rel target = $region3
    $region8: #{squeeze_excitation.1} parent=1 // loop_exit
      _
    %501 = vsyncpa [#allocation3], 1
    %s502 = scalar_lea.sflag [#allocation3], 1
    %503 = vsyncpa %s502, 1
    %504 = vsyncpa [#allocation4], 1
    %s505 = scalar_lea.sflag [#allocation4], 1
    %506 = vsyncpa %s505, 1

</llo_original>
